<compile_context>
chip_gen: v5e
topology: v5e:2x2
jax: 0.10.0
libtpu: 0.0.40
codegen_flags: <defaults>
</compile_context>

<pallas_src>
import functools

import jax
import jax.numpy as jnp
from jax.experimental import pallas as pl
from jax.experimental.pallas import tpu as pltpu

LANE = 128      # vreg lane width
SUBLANE = 8     # vreg sublane count (f32)
TB_MAX = 1024   # max batch-tile rows (amortizes ~0.35us grid-step overhead)


def _cdiv(a, b):
    return -(-a // b)


def _round_up(x, m):
    return _cdiv(x, m) * m


def _pad2d(a, rows, cols, dtype):
    out = jnp.zeros((rows, cols), dtype)
    return out.at[: a.shape[0], : a.shape[1]].set(a.astype(dtype))


def _pad3d(a, d0, d1, d2, dtype):
    out = jnp.zeros((d0, d1, d2), dtype)
    return out.at[: a.shape[0], : a.shape[1], : a.shape[2]].set(a.astype(dtype))


def _pad_rows(a, rows):
    if a.shape[0] == rows:
        return a
    pad = [(0, rows - a.shape[0])] + [(0, 0)] * (a.ndim - 1)
    return jnp.pad(a, pad)


def _fused_kernel(pref_ref, inp_ref, tag_ref, emb_ref, temb_ref,
                  w1p_ref, w1e_ref, w1t_ref, b1_ref,
                  w2_ref, b2_ref, w3_ref, b3_ref, out_ref,
                  *, size_prefix, context_size, size_tag, matmul_dtype):
    f32 = jnp.float32
    tb = pref_ref.shape[0]
    h1p = b1_ref.shape[-1]

    # ----- linear1 as a sum of per-segment partials (no concatenated x ever) ---
    h1 = jnp.zeros((tb, h1p), f32) + b1_ref[...]            # broadcast bias

    # prefix features: K = size_prefix is tiny -> exact VPU broadcast-MACs.
    pref = pref_ref[...]                                     # (tb, size_prefix) f32
    w1p = w1p_ref[...]                                       # (size_prefix, h1p) f32
    for k in range(size_prefix):
        h1 = h1 + pref[:, k:k + 1] * w1p[k:k + 1, :]

    # word-embedding gathers: one-hot (tb, vocab_pad) x table (vocab_pad, E) on MXU.
    ids = inp_ref[...]                                       # (tb, ctx) int32
    vocab_pad = emb_ref.shape[0]
    lane_v = jax.lax.broadcasted_iota(jnp.int32, (tb, vocab_pad), 1)
    emb = emb_ref[...]                                       # (vocab_pad, E) matmul_dtype
    for c in range(context_size):
        onehot = (lane_v == ids[:, c:c + 1]).astype(matmul_dtype)
        g = jnp.dot(onehot, emb, preferred_element_type=f32)         # gathered rows
        h1 = h1 + jnp.dot(g.astype(matmul_dtype), w1e_ref[c],
                          preferred_element_type=f32)

    # tag-embedding gather.
    tag = tag_ref[...]                                       # (tb, 1) int32
    ntag_pad = temb_ref.shape[0]
    lane_t = jax.lax.broadcasted_iota(jnp.int32, (tb, ntag_pad), 1)
    onehot_t = (lane_t == tag).astype(matmul_dtype)
    gt = jnp.dot(onehot_t, temb_ref[...], preferred_element_type=f32)
    h1 = h1 + jnp.dot(gt.astype(matmul_dtype), w1t_ref[...],
                      preferred_element_type=f32)

    h1 = jnp.maximum(h1, 0.0)                                # ReLU

    h2 = jnp.dot(h1.astype(matmul_dtype), w2_ref[...],
                 preferred_element_type=f32) + b2_ref[...]
    h2 = jnp.maximum(h2, 0.0)                                # ReLU

    logits = jnp.dot(h2.astype(matmul_dtype), w3_ref[...],
                     preferred_element_type=f32) + b3_ref[...]

    # Mask padded tag columns so they don't corrupt the softmax normalizer.
    col = jax.lax.broadcasted_iota(jnp.int32, logits.shape, 1)
    logits = jnp.where(col < size_tag, logits, jnp.float32(-1e30))

    # Numerically stable log_softmax; exp/log on the EUP, reductions on the XLU.
    m = jnp.max(logits, axis=-1, keepdims=True)
    z = logits - m
    lse = jnp.log(jnp.sum(jnp.exp(z), axis=-1, keepdims=True))
    # Narrow store: only the real size_tag lanes hit HBM.
    out_ref[...] = (z - lse)[:, :size_tag].astype(out_ref.dtype)


def rand_init_embedding_forward(params, inputs, inputs_pref, prev_tag, batch_size,
                                matmul_dtype=jnp.float32):
    """Mirrors RandInitEmbedding.forward.

    inputs:      [batch, context_size] int32 word indices
    inputs_pref: [batch, size_prefix]  float32 prefix features
    prev_tag:    [batch] int32 previous-tag indices
    returns:     [batch, size_tag] float32 log-probs
    """
    emb_tbl = params["emb"]
    tag_tbl = params["tag_emb"]
    vocab, emb_dim = emb_tbl.shape
    ntag, tag_dim = tag_tbl.shape

    inputs = inputs.reshape(batch_size, -1).astype(jnp.int32)
    context_size = inputs.shape[-1]
    inputs_pref = inputs_pref.reshape(batch_size, -1).astype(jnp.float32)
    size_prefix = inputs_pref.shape[-1]
    prev_tag = prev_tag.reshape(batch_size, 1).astype(jnp.int32)

    h1 = params["w1"].shape[-1]
    h2 = params["w2"].shape[-1]
    size_tag = params["b3"].shape[-1]

    # Lane-aligned padded sizes for the VMEM-resident weights / tables.
    vocab_pad = _round_up(vocab, LANE)
    ntag_pad = _round_up(ntag, LANE)
    e_pad = _round_up(emb_dim, LANE)
    t_pad = _round_up(tag_dim, LANE)
    h1p = _round_up(h1, LANE)
    h2p = _round_up(h2, LANE)
    outp = _round_up(size_tag, LANE)
    # TODO(synk): for large vocabularies (one-hot table no longer VMEM-resident),
    # replace the one-hot matmul gather with scalar-prefetched indices +
    # pl.Element row-gather BlockSpecs / manual DMA gather.

    # Split linear1's weight by input segment (prefix | ctx word embeds | tag embed).
    w1 = params["w1"]
    w1_pref = w1[:size_prefix]
    w1_emb = w1[size_prefix: size_prefix + context_size * emb_dim].reshape(
        context_size, emb_dim, h1)
    w1_tag = w1[size_prefix + context_size * emb_dim:]

    emb_p = _pad2d(emb_tbl, vocab_pad, e_pad, matmul_dtype)
    temb_p = _pad2d(tag_tbl, ntag_pad, t_pad, matmul_dtype)
    w1p_p = _pad2d(w1_pref, size_prefix, h1p, jnp.float32)      # used on the VPU
    w1e_p = _pad3d(w1_emb, context_size, e_pad, h1p, matmul_dtype)
    w1t_p = _pad2d(w1_tag, t_pad, h1p, matmul_dtype)
    w2_p = _pad2d(params["w2"], h1p, h2p, matmul_dtype)
    w3_p = _pad2d(params["w3"], h2p, outp, matmul_dtype)
    b1_p = _pad2d(params["b1"].reshape(1, -1), 1, h1p, jnp.float32)
    b2_p = _pad2d(params["b2"].reshape(1, -1), 1, h2p, jnp.float32)
    b3_p = _pad2d(params["b3"].reshape(1, -1), 1, outp, jnp.float32)

    # Batch tiling: big tiles (<=1024 rows), <=7 pad rows per tile, and an even
    # number of tiles when the batch is big enough so both v7x TensorCores work.
    nb = max(1, _cdiv(batch_size, TB_MAX))
    if batch_size >= 256 and nb % 2 == 1:
        nb += 1
    tb = _round_up(_cdiv(batch_size, nb), SUBLANE)
    b_pad = tb * nb

    pref_in = _pad_rows(inputs_pref, b_pad)
    ids_in = _pad_rows(inputs, b_pad)
    tag_in = _pad_rows(prev_tag, b_pad)

    kernel = functools.partial(
        _fused_kernel, size_prefix=size_prefix, context_size=context_size,
        size_tag=size_tag, matmul_dtype=matmul_dtype)

    res = lambda i: (0, 0)      # resident weights: same block every grid step

    out_padded = pl.pallas_call(
        kernel,
        out_shape=jax.ShapeDtypeStruct((b_pad, size_tag), jnp.float32),
        grid_spec=pltpu.PrefetchScalarGridSpec(
            num_scalar_prefetch=0,
            grid=(nb,),
            in_specs=[
                pl.BlockSpec((tb, size_prefix), lambda i: (i, 0)),    # prefix feats
                pl.BlockSpec((tb, context_size), lambda i: (i, 0)),   # word ids
                pl.BlockSpec((tb, 1), lambda i: (i, 0)),              # prev tag
                pl.BlockSpec((vocab_pad, e_pad), res),                # word emb table
                pl.BlockSpec((ntag_pad, t_pad), res),                 # tag emb table
                pl.BlockSpec((size_prefix, h1p), res),                # w1 (prefix rows)
                pl.BlockSpec((context_size, e_pad, h1p), lambda i: (0, 0, 0)),  # w1 (emb)
                pl.BlockSpec((t_pad, h1p), res),                      # w1 (tag rows)
                pl.BlockSpec((1, h1p), res),                          # b1
                pl.BlockSpec((h1p, h2p), res),                        # w2
                pl.BlockSpec((1, h2p), res),                          # b2
                pl.BlockSpec((h2p, outp), res),                       # w3
                pl.BlockSpec((1, outp), res),                         # b3
            ],
            out_specs=pl.BlockSpec((tb, size_tag), lambda i: (i, 0)), # narrow output
        ),
        compiler_params=pltpu.CompilerParams(
            # Independent batch tiles -> shard across v7x's 2 TensorCores.
            # Working set per tile is << 32 MiB, so no vmem_limit override needed.
            dimension_semantics=("parallel",),
        ),
    )(pref_in, ids_in, tag_in, emb_p, temb_p,
      w1p_p, w1e_p, w1t_p, b1_p, w2_p, b2_p, w3_p, b3_p)

    return out_padded[:batch_size]


def _reference_forward(params, inputs, inputs_pref, prev_tag, batch_size):
    """Pure-JAX f32 reference (matches the PyTorch forward)."""
    embeds = jnp.take(params["emb"], inputs, axis=0).reshape(batch_size, -1)
    tag_embeds = jnp.take(params["tag_emb"], prev_tag, axis=0).reshape(batch_size, -1)
    x = jnp.concatenate([inputs_pref.reshape(batch_size, -1), embeds, tag_embeds], -1)
    h1 = jnp.maximum(x @ params["w1"] + params["b1"], 0.0)
    h2 = jnp.maximum(h1 @ params["w2"] + params["b2"], 0.0)
    logits = h2 @ params["w3"] + params["b3"]
    return jax.nn.log_softmax(logits, axis=-1)


def init_params(key, vocab_size, embedding_dim, tag_embedding_dim,
                size_prefix, size_tag, context_size):
    """Deterministic synthetic parameters matching the module's shapes.

    nn.Linear stores W as (out, in); we keep them transposed as (in, out) so the
    kernel computes x @ W + b directly on the MXU.
    """
    din1 = context_size * embedding_dim + size_prefix + tag_embedding_dim
    keys = jax.random.split(key, 8)
    return {
        "emb":     jax.random.normal(keys[0], (vocab_size, embedding_dim), jnp.float32),
        "tag_emb": jax.random.normal(keys[1], (size_tag + 1, tag_embedding_dim), jnp.float32),
        "w1": 0.1 * jax.random.normal(keys[2], (din1, 120), jnp.float32),
        "b1": 0.1 * jax.random.normal(keys[3], (1, 120), jnp.float32),
        "w2": 0.1 * jax.random.normal(keys[4], (120, 30), jnp.float32),
        "b2": 0.1 * jax.random.normal(keys[5], (1, 30), jnp.float32),
        "w3": 0.1 * jax.random.normal(keys[6], (30, size_tag), jnp.float32),
        "b3": 0.1 * jax.random.normal(keys[7], (1, size_tag), jnp.float32),
    }


if __name__ == "__main__":
    # Small, forward-consistent shapes.
    vocab_size = 50
    embedding_dim = 8
    tag_embedding_dim = 6
    size_prefix = 5
    size_tag = 10
    context_size = 3
    batch_size = 2

    key = jax.random.PRNGKey(0)
    kp, ki, kpr, kt = jax.random.split(key, 4)

    params = init_params(kp, vocab_size, embedding_dim, tag_embedding_dim,
                         size_prefix, size_tag, context_size)

    inputs = jax.random.randint(ki, (batch_size, context_size), 0, vocab_size,
                                dtype=jnp.int32)
    inputs_pref = jax.random.normal(kpr, (batch_size, size_prefix), jnp.float32)
    prev_tag = jax.random.randint(kt, (batch_size,), 0, size_tag + 1, dtype=jnp.int32)

    log_probs = rand_init_embedding_forward(params, inputs, inputs_pref, prev_tag,
                                            batch_size)
    log_probs = jax.block_until_ready(log_probs)

    # Sanity 1: shape + each row must sum (in prob space) to ~1.
    assert log_probs.shape == (batch_size, size_tag)
    row_sums = jnp.exp(log_probs).sum(axis=1)
    assert bool(jnp.all(jnp.abs(row_sums - 1.0) < 1e-4))

    # Sanity 2: close to the pure-f32 reference (f32 operands in-kernel; small
    # slack covers MXU default-precision rounding).
    ref = _reference_forward(params, inputs, inputs_pref, prev_tag, batch_size)
    assert bool(jnp.max(jnp.abs(log_probs - ref)) < 0.05)

    print("KERNEL_OK")
</pallas_src>

<mosaic_0001>
module attributes {stable_mosaic.version = 11 : i64} {
  func.func @_fused_kernel(%arg0: i32, %arg1: memref<8x5xf32, #tpu.memory_space<vmem>>, %arg2: memref<8x3xi32, #tpu.memory_space<vmem>>, %arg3: memref<8x1xi32, #tpu.memory_space<vmem>>, %arg4: memref<128x128xf32, #tpu.memory_space<vmem>>, %arg5: memref<128x128xf32, #tpu.memory_space<vmem>>, %arg6: memref<5x128xf32, #tpu.memory_space<vmem>>, %arg7: memref<3x128x128xf32, #tpu.memory_space<vmem>>, %arg8: memref<128x128xf32, #tpu.memory_space<vmem>>, %arg9: memref<1x128xf32, #tpu.memory_space<vmem>>, %arg10: memref<128x128xf32, #tpu.memory_space<vmem>>, %arg11: memref<1x128xf32, #tpu.memory_space<vmem>>, %arg12: memref<128x128xf32, #tpu.memory_space<vmem>>, %arg13: memref<1x128xf32, #tpu.memory_space<vmem>>, %arg14: memref<8x10xf32, #tpu.memory_space<vmem>>) attributes {dimension_semantics = [#tpu.dimension_semantics<parallel>], iteration_bounds = array<i64: 1>, scalar_prefetch = 0 : i64, scratch_operands = 0 : i64, tpu.core_type = #tpu.core_type<tc>, window_params = [{transform_indices = @transform_0, window_bounds = array<i64: 8, 5>}, {transform_indices = @transform_1, window_bounds = array<i64: 8, 3>}, {transform_indices = @transform_2, window_bounds = array<i64: 8, 1>}, {pipeline_mode = #tpu.pipeline_mode<synchronous>, transform_indices = @transform_3, window_bounds = array<i64: 128, 128>}, {pipeline_mode = #tpu.pipeline_mode<synchronous>, transform_indices = @transform_4, window_bounds = array<i64: 128, 128>}, {pipeline_mode = #tpu.pipeline_mode<synchronous>, transform_indices = @transform_5, window_bounds = array<i64: 5, 128>}, {pipeline_mode = #tpu.pipeline_mode<synchronous>, transform_indices = @transform_6, window_bounds = array<i64: 3, 128, 128>}, {pipeline_mode = #tpu.pipeline_mode<synchronous>, transform_indices = @transform_7, window_bounds = array<i64: 128, 128>}, {pipeline_mode = #tpu.pipeline_mode<synchronous>, transform_indices = @transform_8, window_bounds = array<i64: 1, 128>}, {pipeline_mode = #tpu.pipeline_mode<synchronous>, transform_indices = @transform_9, window_bounds = array<i64: 128, 128>}, {pipeline_mode = #tpu.pipeline_mode<synchronous>, transform_indices = @transform_10, window_bounds = array<i64: 1, 128>}, {pipeline_mode = #tpu.pipeline_mode<synchronous>, transform_indices = @transform_11, window_bounds = array<i64: 128, 128>}, {pipeline_mode = #tpu.pipeline_mode<synchronous>, transform_indices = @transform_12, window_bounds = array<i64: 1, 128>}, {transform_indices = @transform_13, window_bounds = array<i64: 8, 10>}]} {
    %cst = arith.constant 0.000000e+00 : f32
    %0 = vector.broadcast %cst : f32 to vector<8x128xf32>
    %c0 = arith.constant 0 : index
    %c0_0 = arith.constant 0 : index
    %1 = vector.load %arg9[%c0, %c0_0] : memref<1x128xf32, #tpu.memory_space<vmem>>, vector<1x128xf32>
    %2 = vector.broadcast %1 : vector<1x128xf32> to vector<8x128xf32>
    %3 = arith.addf %0, %2 : vector<8x128xf32>
    %c0_1 = arith.constant 0 : index
    %c0_2 = arith.constant 0 : index
    %4 = vector.load %arg1[%c0_1, %c0_2] : memref<8x5xf32, #tpu.memory_space<vmem>>, vector<8x5xf32>
    %c0_3 = arith.constant 0 : index
    %c0_4 = arith.constant 0 : index
    %5 = vector.load %arg6[%c0_3, %c0_4] : memref<5x128xf32, #tpu.memory_space<vmem>>, vector<5x128xf32>
    %6 = vector.extract_strided_slice %4 {offsets = [0, 0], sizes = [8, 1], strides = [1, 1]} : vector<8x5xf32> to vector<8x1xf32>
    %7 = vector.extract_strided_slice %5 {offsets = [0, 0], sizes = [1, 128], strides = [1, 1]} : vector<5x128xf32> to vector<1x128xf32>
    %8 = vector.broadcast %6 : vector<8x1xf32> to vector<8x128xf32>
    %9 = vector.broadcast %7 : vector<1x128xf32> to vector<8x128xf32>
    %10 = arith.mulf %8, %9 : vector<8x128xf32>
    %11 = arith.addf %3, %10 : vector<8x128xf32>
    %12 = vector.extract_strided_slice %4 {offsets = [0, 1], sizes = [8, 1], strides = [1, 1]} : vector<8x5xf32> to vector<8x1xf32>
    %13 = vector.extract_strided_slice %5 {offsets = [1, 0], sizes = [1, 128], strides = [1, 1]} : vector<5x128xf32> to vector<1x128xf32>
    %14 = vector.broadcast %12 : vector<8x1xf32> to vector<8x128xf32>
    %15 = vector.broadcast %13 : vector<1x128xf32> to vector<8x128xf32>
    %16 = arith.mulf %14, %15 : vector<8x128xf32>
    %17 = arith.addf %11, %16 : vector<8x128xf32>
    %18 = vector.extract_strided_slice %4 {offsets = [0, 2], sizes = [8, 1], strides = [1, 1]} : vector<8x5xf32> to vector<8x1xf32>
    %19 = vector.extract_strided_slice %5 {offsets = [2, 0], sizes = [1, 128], strides = [1, 1]} : vector<5x128xf32> to vector<1x128xf32>
    %20 = vector.broadcast %18 : vector<8x1xf32> to vector<8x128xf32>
    %21 = vector.broadcast %19 : vector<1x128xf32> to vector<8x128xf32>
    %22 = arith.mulf %20, %21 : vector<8x128xf32>
    %23 = arith.addf %17, %22 : vector<8x128xf32>
    %24 = vector.extract_strided_slice %4 {offsets = [0, 3], sizes = [8, 1], strides = [1, 1]} : vector<8x5xf32> to vector<8x1xf32>
    %25 = vector.extract_strided_slice %5 {offsets = [3, 0], sizes = [1, 128], strides = [1, 1]} : vector<5x128xf32> to vector<1x128xf32>
    %26 = vector.broadcast %24 : vector<8x1xf32> to vector<8x128xf32>
    %27 = vector.broadcast %25 : vector<1x128xf32> to vector<8x128xf32>
    %28 = arith.mulf %26, %27 : vector<8x128xf32>
    %29 = arith.addf %23, %28 : vector<8x128xf32>
    %30 = vector.extract_strided_slice %4 {offsets = [0, 4], sizes = [8, 1], strides = [1, 1]} : vector<8x5xf32> to vector<8x1xf32>
    %31 = vector.extract_strided_slice %5 {offsets = [4, 0], sizes = [1, 128], strides = [1, 1]} : vector<5x128xf32> to vector<1x128xf32>
    %32 = vector.broadcast %30 : vector<8x1xf32> to vector<8x128xf32>
    %33 = vector.broadcast %31 : vector<1x128xf32> to vector<8x128xf32>
    %34 = arith.mulf %32, %33 : vector<8x128xf32>
    %35 = arith.addf %29, %34 : vector<8x128xf32>
    %c0_5 = arith.constant 0 : index
    %c0_6 = arith.constant 0 : index
    %36 = vector.load %arg2[%c0_5, %c0_6] : memref<8x3xi32, #tpu.memory_space<vmem>>, vector<8x3xi32>
    %37 = tpu.iota {dimensions = array<i32: 1>} : vector<8x128xi32>
    %c0_7 = arith.constant 0 : index
    %c0_8 = arith.constant 0 : index
    %38 = vector.load %arg4[%c0_7, %c0_8] : memref<128x128xf32, #tpu.memory_space<vmem>>, vector<128x128xf32>
    %39 = vector.extract_strided_slice %36 {offsets = [0, 0], sizes = [8, 1], strides = [1, 1]} : vector<8x3xi32> to vector<8x1xi32>
    %40 = vector.broadcast %39 : vector<8x1xi32> to vector<8x128xi32>
    %41 = arith.cmpi eq, %37, %40 : vector<8x128xi32>
    %42 = arith.extui %41 : vector<8x128xi1> to vector<8x128xi32>
    %43 = arith.sitofp %42 : vector<8x128xi32> to vector<8x128xf32>
    %cst_9 = arith.constant dense<0.000000e+00> : vector<8x128xf32>
    %44 = tpu.matmul %43, %38, %cst_9 {dimension_numbers = #tpu.dot_dimension_numbers<[1], [0], [0], [1], [0, 0, 1, 1], [], []>} : vector<8x128xf32>, vector<128x128xf32>, vector<8x128xf32> -> vector<8x128xf32>
    %c0_10 = arith.constant 0 : index
    %c0_11 = arith.constant 0 : index
    %c0_12 = arith.constant 0 : index
    %45 = vector.load %arg7[%c0_10, %c0_11, %c0_12] : memref<3x128x128xf32, #tpu.memory_space<vmem>>, vector<1x128x128xf32>
    %46 = vector.shape_cast %45 : vector<1x128x128xf32> to vector<128x128xf32>
    %cst_13 = arith.constant dense<0.000000e+00> : vector<8x128xf32>
    %47 = tpu.matmul %44, %46, %cst_13 {dimension_numbers = #tpu.dot_dimension_numbers<[1], [0], [0], [1], [0, 0, 1, 1], [], []>} : vector<8x128xf32>, vector<128x128xf32>, vector<8x128xf32> -> vector<8x128xf32>
    %48 = arith.addf %35, %47 : vector<8x128xf32>
    %49 = vector.extract_strided_slice %36 {offsets = [0, 1], sizes = [8, 1], strides = [1, 1]} : vector<8x3xi32> to vector<8x1xi32>
    %50 = vector.broadcast %49 : vector<8x1xi32> to vector<8x128xi32>
    %51 = arith.cmpi eq, %37, %50 : vector<8x128xi32>
    %52 = arith.extui %51 : vector<8x128xi1> to vector<8x128xi32>
    %53 = arith.sitofp %52 : vector<8x128xi32> to vector<8x128xf32>
    %cst_14 = arith.constant dense<0.000000e+00> : vector<8x128xf32>
    %54 = tpu.matmul %53, %38, %cst_14 {dimension_numbers = #tpu.dot_dimension_numbers<[1], [0], [0], [1], [0, 0, 1, 1], [], []>} : vector<8x128xf32>, vector<128x128xf32>, vector<8x128xf32> -> vector<8x128xf32>
    %c1 = arith.constant 1 : index
    %c0_15 = arith.constant 0 : index
    %c0_16 = arith.constant 0 : index
    %55 = vector.load %arg7[%c1, %c0_15, %c0_16] : memref<3x128x128xf32, #tpu.memory_space<vmem>>, vector<1x128x128xf32>
    %56 = vector.shape_cast %55 : vector<1x128x128xf32> to vector<128x128xf32>
    %cst_17 = arith.constant dense<0.000000e+00> : vector<8x128xf32>
    %57 = tpu.matmul %54, %56, %cst_17 {dimension_numbers = #tpu.dot_dimension_numbers<[1], [0], [0], [1], [0, 0, 1, 1], [], []>} : vector<8x128xf32>, vector<128x128xf32>, vector<8x128xf32> -> vector<8x128xf32>
    %58 = arith.addf %48, %57 : vector<8x128xf32>
    %59 = vector.extract_strided_slice %36 {offsets = [0, 2], sizes = [8, 1], strides = [1, 1]} : vector<8x3xi32> to vector<8x1xi32>
    %60 = vector.broadcast %59 : vector<8x1xi32> to vector<8x128xi32>
    %61 = arith.cmpi eq, %37, %60 : vector<8x128xi32>
    %62 = arith.extui %61 : vector<8x128xi1> to vector<8x128xi32>
    %63 = arith.sitofp %62 : vector<8x128xi32> to vector<8x128xf32>
    %cst_18 = arith.constant dense<0.000000e+00> : vector<8x128xf32>
    %64 = tpu.matmul %63, %38, %cst_18 {dimension_numbers = #tpu.dot_dimension_numbers<[1], [0], [0], [1], [0, 0, 1, 1], [], []>} : vector<8x128xf32>, vector<128x128xf32>, vector<8x128xf32> -> vector<8x128xf32>
    %c2 = arith.constant 2 : index
    %c0_19 = arith.constant 0 : index
    %c0_20 = arith.constant 0 : index
    %65 = vector.load %arg7[%c2, %c0_19, %c0_20] : memref<3x128x128xf32, #tpu.memory_space<vmem>>, vector<1x128x128xf32>
    %66 = vector.shape_cast %65 : vector<1x128x128xf32> to vector<128x128xf32>
    %cst_21 = arith.constant dense<0.000000e+00> : vector<8x128xf32>
    %67 = tpu.matmul %64, %66, %cst_21 {dimension_numbers = #tpu.dot_dimension_numbers<[1], [0], [0], [1], [0, 0, 1, 1], [], []>} : vector<8x128xf32>, vector<128x128xf32>, vector<8x128xf32> -> vector<8x128xf32>
    %68 = arith.addf %58, %67 : vector<8x128xf32>
    %c0_22 = arith.constant 0 : index
    %c0_23 = arith.constant 0 : index
    %69 = vector.load %arg3[%c0_22, %c0_23] : memref<8x1xi32, #tpu.memory_space<vmem>>, vector<8x1xi32>
    %70 = tpu.iota {dimensions = array<i32: 1>} : vector<8x128xi32>
    %71 = vector.broadcast %69 : vector<8x1xi32> to vector<8x128xi32>
    %72 = arith.cmpi eq, %70, %71 : vector<8x128xi32>
    %73 = arith.extui %72 : vector<8x128xi1> to vector<8x128xi32>
    %74 = arith.sitofp %73 : vector<8x128xi32> to vector<8x128xf32>
    %c0_24 = arith.constant 0 : index
    %c0_25 = arith.constant 0 : index
    %75 = vector.load %arg5[%c0_24, %c0_25] : memref<128x128xf32, #tpu.memory_space<vmem>>, vector<128x128xf32>
    %cst_26 = arith.constant dense<0.000000e+00> : vector<8x128xf32>
    %76 = tpu.matmul %74, %75, %cst_26 {dimension_numbers = #tpu.dot_dimension_numbers<[1], [0], [0], [1], [0, 0, 1, 1], [], []>} : vector<8x128xf32>, vector<128x128xf32>, vector<8x128xf32> -> vector<8x128xf32>
    %c0_27 = arith.constant 0 : index
    %c0_28 = arith.constant 0 : index
    %77 = vector.load %arg8[%c0_27, %c0_28] : memref<128x128xf32, #tpu.memory_space<vmem>>, vector<128x128xf32>
    %cst_29 = arith.constant dense<0.000000e+00> : vector<8x128xf32>
    %78 = tpu.matmul %76, %77, %cst_29 {dimension_numbers = #tpu.dot_dimension_numbers<[1], [0], [0], [1], [0, 0, 1, 1], [], []>} : vector<8x128xf32>, vector<128x128xf32>, vector<8x128xf32> -> vector<8x128xf32>
    %79 = arith.addf %68, %78 : vector<8x128xf32>
    %cst_30 = arith.constant 0.000000e+00 : f32
    %80 = vector.broadcast %cst_30 : f32 to vector<8x128xf32>
    %81 = arith.maximumf %79, %80 : vector<8x128xf32>
    %c0_31 = arith.constant 0 : index
    %c0_32 = arith.constant 0 : index
    %82 = vector.load %arg10[%c0_31, %c0_32] : memref<128x128xf32, #tpu.memory_space<vmem>>, vector<128x128xf32>
    %cst_33 = arith.constant dense<0.000000e+00> : vector<8x128xf32>
    %83 = tpu.matmul %81, %82, %cst_33 {dimension_numbers = #tpu.dot_dimension_numbers<[1], [0], [0], [1], [0, 0, 1, 1], [], []>} : vector<8x128xf32>, vector<128x128xf32>, vector<8x128xf32> -> vector<8x128xf32>
    %c0_34 = arith.constant 0 : index
    %c0_35 = arith.constant 0 : index
    %84 = vector.load %arg11[%c0_34, %c0_35] : memref<1x128xf32, #tpu.memory_space<vmem>>, vector<1x128xf32>
    %85 = vector.broadcast %84 : vector<1x128xf32> to vector<8x128xf32>
    %86 = arith.addf %83, %85 : vector<8x128xf32>
    %cst_36 = arith.constant 0.000000e+00 : f32
    %87 = vector.broadcast %cst_36 : f32 to vector<8x128xf32>
    %88 = arith.maximumf %86, %87 : vector<8x128xf32>
    %c0_37 = arith.constant 0 : index
    %c0_38 = arith.constant 0 : index
    %89 = vector.load %arg12[%c0_37, %c0_38] : memref<128x128xf32, #tpu.memory_space<vmem>>, vector<128x128xf32>
    %cst_39 = arith.constant dense<0.000000e+00> : vector<8x128xf32>
    %90 = tpu.matmul %88, %89, %cst_39 {dimension_numbers = #tpu.dot_dimension_numbers<[1], [0], [0], [1], [0, 0, 1, 1], [], []>} : vector<8x128xf32>, vector<128x128xf32>, vector<8x128xf32> -> vector<8x128xf32>
    %c0_40 = arith.constant 0 : index
    %c0_41 = arith.constant 0 : index
    %91 = vector.load %arg13[%c0_40, %c0_41] : memref<1x128xf32, #tpu.memory_space<vmem>>, vector<1x128xf32>
    %92 = vector.broadcast %91 : vector<1x128xf32> to vector<8x128xf32>
    %93 = arith.addf %90, %92 : vector<8x128xf32>
    %94 = tpu.iota {dimensions = array<i32: 1>} : vector<8x128xi32>
    %c10_i32 = arith.constant 10 : i32
    %95 = vector.broadcast %c10_i32 : i32 to vector<8x128xi32>
    %96 = arith.cmpi slt, %94, %95 : vector<8x128xi32>
    %cst_42 = arith.constant -1.000000e+30 : f32
    %97 = vector.broadcast %cst_42 : f32 to vector<8x128xf32>
    %98 = arith.select %96, %93, %97 : vector<8x128xi1>, vector<8x128xf32>
    %cst_43 = arith.constant dense<0xFF800000> : vector<8xf32>
    %99 = vector.multi_reduction <maximumf>, %98, %cst_43 [1] : vector<8x128xf32> to vector<8xf32>
    %100 = vector.shape_cast %99 : vector<8xf32> to vector<8x1xf32>
    %101 = vector.broadcast %100 : vector<8x1xf32> to vector<8x128xf32>
    %102 = arith.subf %98, %101 : vector<8x128xf32>
    %103 = math.exp %102 : vector<8x128xf32>
    %cst_44 = arith.constant dense<0.000000e+00> : vector<8xf32>
    %104 = vector.multi_reduction <add>, %103, %cst_44 [1] : vector<8x128xf32> to vector<8xf32>
    %105 = vector.shape_cast %104 : vector<8xf32> to vector<8x1xf32>
    %106 = math.log %105 : vector<8x1xf32>
    %107 = vector.broadcast %106 : vector<8x1xf32> to vector<8x128xf32>
    %108 = arith.subf %102, %107 : vector<8x128xf32>
    %109 = vector.extract_strided_slice %108 {offsets = [0, 0], sizes = [8, 10], strides = [1, 1]} : vector<8x128xf32> to vector<8x10xf32>
    %c0_45 = arith.constant 0 : index
    %c0_46 = arith.constant 0 : index
    %110 = vector.load %arg14[%c0_45, %c0_46] : memref<8x10xf32, #tpu.memory_space<vmem>>, vector<8x10xf32>
    tpu.vector_store %arg14[%c0_45, %c0_46], %109 {strides = array<i32>} : memref<8x10xf32, #tpu.memory_space<vmem>>, vector<8x10xf32>,
    return
  }
  func.func @transform_0(%arg0: i32) -> (i32, i32) {
    %c0_i32 = arith.constant 0 : i32
    %c0_i32_0 = arith.constant 0 : i32
    return %arg0, %c0_i32 : i32, i32
  }
  func.func @transform_1(%arg0: i32) -> (i32, i32) {
    %c0_i32 = arith.constant 0 : i32
    %c0_i32_0 = arith.constant 0 : i32
    return %arg0, %c0_i32 : i32, i32
  }
  func.func @transform_2(%arg0: i32) -> (i32, i32) {
    %c0_i32 = arith.constant 0 : i32
    %c0_i32_0 = arith.constant 0 : i32
    return %arg0, %c0_i32 : i32, i32
  }
  func.func @transform_3(%arg0: i32) -> (i32, i32) {
    %c0_i32 = arith.constant 0 : i32
    %c0_i32_0 = arith.constant 0 : i32
    %c0_i32_1 = arith.constant 0 : i32
    return %c0_i32, %c0_i32_0 : i32, i32
  }
  func.func @transform_4(%arg0: i32) -> (i32, i32) {
    %c0_i32 = arith.constant 0 : i32
    %c0_i32_0 = arith.constant 0 : i32
    %c0_i32_1 = arith.constant 0 : i32
    return %c0_i32, %c0_i32_0 : i32, i32
  }
  func.func @transform_5(%arg0: i32) -> (i32, i32) {
    %c0_i32 = arith.constant 0 : i32
    %c0_i32_0 = arith.constant 0 : i32
    %c0_i32_1 = arith.constant 0 : i32
    return %c0_i32, %c0_i32_0 : i32, i32
  }
  func.func @transform_6(%arg0: i32) -> (i32, i32, i32) {
    %c0_i32 = arith.constant 0 : i32
    %c0_i32_0 = arith.constant 0 : i32
    %c0_i32_1 = arith.constant 0 : i32
    %c0_i32_2 = arith.constant 0 : i32
    return %c0_i32, %c0_i32_0, %c0_i32_1 : i32, i32, i32
  }
  func.func @transform_7(%arg0: i32) -> (i32, i32) {
    %c0_i32 = arith.constant 0 : i32
    %c0_i32_0 = arith.constant 0 : i32
    %c0_i32_1 = arith.constant 0 : i32
    return %c0_i32, %c0_i32_0 : i32, i32
  }
  func.func @transform_8(%arg0: i32) -> (i32, i32) {
    %c0_i32 = arith.constant 0 : i32
    %c0_i32_0 = arith.constant 0 : i32
    %c0_i32_1 = arith.constant 0 : i32
    return %c0_i32, %c0_i32_0 : i32, i32
  }
  func.func @transform_9(%arg0: i32) -> (i32, i32) {
    %c0_i32 = arith.constant 0 : i32
    %c0_i32_0 = arith.constant 0 : i32
    %c0_i32_1 = arith.constant 0 : i32
    return %c0_i32, %c0_i32_0 : i32, i32
  }
  func.func @transform_10(%arg0: i32) -> (i32, i32) {
    %c0_i32 = arith.constant 0 : i32
    %c0_i32_0 = arith.constant 0 : i32
    %c0_i32_1 = arith.constant 0 : i32
    return %c0_i32, %c0_i32_0 : i32, i32
  }
  func.func @transform_11(%arg0: i32) -> (i32, i32) {
    %c0_i32 = arith.constant 0 : i32
    %c0_i32_0 = arith.constant 0 : i32
    %c0_i32_1 = arith.constant 0 : i32
    return %c0_i32, %c0_i32_0 : i32, i32
  }
  func.func @transform_12(%arg0: i32) -> (i32, i32) {
    %c0_i32 = arith.constant 0 : i32
    %c0_i32_0 = arith.constant 0 : i32
    %c0_i32_1 = arith.constant 0 : i32
    return %c0_i32, %c0_i32_0 : i32, i32
  }
  func.func @transform_13(%arg0: i32) -> (i32, i32) {
    %c0_i32 = arith.constant 0 : i32
    %c0_i32_0 = arith.constant 0 : i32
    return %arg0, %c0_i32 : i32, i32
  }
}

</mosaic_0001>

<llo_original>
// kernel: tpu_custom_call.1
$region0: #{tpu_custom_call.1}
  #allocation0 [shape = 'u32[]', space=smem, size = 0x4, offset = 0x4, fixed_abs, tag = 'smem constant byte address 0x4 - core index']
  #allocation1 [shape = 'u32[72,128]{1,0:T(1,128)}', space=vmem, size = 0x9000, scoped, tag = 'internal scratch']
  %s0 = inlined_call_operand.vmem [shape: f32[8,5], index: 0, kind: input, shape index: {}]
  %s1 = inlined_call_operand.vmem [shape: s32[8,3], index: 1, kind: input, shape index: {}]
  %s2 = inlined_call_operand.vmem [shape: s32[8,1], index: 2, kind: input, shape index: {}]
  %s3 = inlined_call_operand.hbm [shape: f32[128,128], index: 3, kind: input, shape index: {}]
  %s4 = inlined_call_operand.hbm [shape: f32[128,128], index: 4, kind: input, shape index: {}]
  %s5 = inlined_call_operand.vmem [shape: f32[5,128], index: 5, kind: input, shape index: {}]
  %s6 = inlined_call_operand.hbm [shape: f32[3,128,128], index: 6, kind: input, shape index: {}]
  %s7 = inlined_call_operand.hbm [shape: f32[128,128], index: 7, kind: input, shape index: {}]
  %s8 = inlined_call_operand.vmem [shape: f32[1,128], index: 8, kind: input, shape index: {}]
  %s9 = inlined_call_operand.hbm [shape: f32[128,128], index: 9, kind: input, shape index: {}]
  %s10 = inlined_call_operand.vmem [shape: f32[1,128], index: 10, kind: input, shape index: {}]
  %s11 = inlined_call_operand.hbm [shape: f32[128,128], index: 11, kind: input, shape index: {}]
  %s12 = inlined_call_operand.vmem [shape: f32[1,128], index: 12, kind: input, shape index: {}]
  %s13 = inlined_call_operand.hbm [shape: f32[8,10], index: 13, kind: output, shape index: {}]
  %s14 = sld [smem:[#allocation0]]
  $region86: #{tpu_custom_call.1} parent=0
    _
  %s16 = ssub.s32 1, %s14
  %s17 = scalar_select 0, %s16, %s14
  $region1: #{tpu_custom_call.1} parent=0
    #allocation2 [shape = 'u8[65536]{0}', space=vmem, size = 0x10000, scoped, tag = 'input window, operand 3, single buffered']
    #allocation3 [shape = 's32[1]{0}', space=sflag, size = 0x4, scoped, tag = 'scoped memory for tpu_custom_call.1']
    #allocation4 [shape = 's32[1]{0}', space=sflag, size = 0x4, scoped, tag = 'scoped memory for tpu_custom_call.1']
    #allocation5 [shape = 'u8[65536]{0}', space=vmem, size = 0x10000, scoped, tag = 'input window, operand 4, single buffered']
    #allocation6 [shape = 's32[1]{0}', space=sflag, size = 0x4, scoped, tag = 'scoped memory for tpu_custom_call.1']
    #allocation7 [shape = 'u8[196608]{0}', space=vmem, size = 0x30000, scoped, tag = 'input window, operand 6, single buffered']
    #allocation8 [shape = 'u8[65536]{0}', space=vmem, size = 0x10000, scoped, tag = 'input window, operand 7, single buffered']
    #allocation9 [shape = 's32[1]{0}', space=sflag, size = 0x4, scoped, tag = 'scoped memory for tpu_custom_call.1']
    #allocation10 [shape = 'u8[65536]{0}', space=vmem, size = 0x10000, scoped, tag = 'input window, operand 9, single buffered']
    #allocation11 [shape = 'u8[65536]{0}', space=vmem, size = 0x10000, scoped, tag = 'input window, operand 11, single buffered']
    #allocation12 [shape = 's32[1]{0}', space=sflag, size = 0x4, scoped, tag = 'scoped memory for tpu_custom_call.1']
    #allocation13 [shape = 'u8[4096]{0}', space=vmem, size = 0x1000, scoped, tag = 'output window, operand 0, single buffered']
    %18 = vsyncpa [#allocation3], 0
    %19 = vsyncpa [#allocation6], 0
    %20 = vsyncpa [#allocation9], 0
    %21 = vsyncpa [#allocation12], 0
    %22 = vsyncpa [#allocation4], 0
    // Predicated region
    $region2: #{tpu_custom_call.1} parent=1 // pred_check
      _
    $region3: #{tpu_custom_call.1} parent=1 // pred_check_branch
      %24 = sbr.rel (0) target = $region5
    $region4: #{tpu_custom_call.1} parent=1 // pred_region
      _
    $region5: #{tpu_custom_call.1} parent=1 // pred_fallthru
      _
    // Predicated region
    $region6: #{tpu_custom_call.1} parent=1 // pred_check
      _
    $region7: #{tpu_custom_call.1} parent=1 // pred_check_branch
      %26 = sbr.rel (0) target = $region9
    $region8: #{tpu_custom_call.1} parent=1 // pred_region
      _
    $region9: #{tpu_custom_call.1} parent=1 // pred_fallthru
      _
    // Predicated region
    $region10: #{tpu_custom_call.1} parent=1 // pred_check
      _
    $region11: #{tpu_custom_call.1} parent=1 // pred_check_branch
      %28 = sbr.rel (0) target = $region13
    $region12: #{tpu_custom_call.1} parent=1 // pred_region
      _
    $region13: #{tpu_custom_call.1} parent=1 // pred_fallthru
      _
    // Predicated region
    $region14: #{tpu_custom_call.1} parent=1 // pred_check
      _
    $region15: #{tpu_custom_call.1} parent=1 // pred_check_branch
      %30 = sbr.rel (0) target = $region17
    $region16: #{tpu_custom_call.1} parent=1 // pred_region
      %32 = vsyncadd [#allocation3], 0
      %s33 = sshll.u32 %s3, 4
      %s34 = int_to_ptr.hbm [resolvable:$true] %s33
      %s35 = sshll.u32 [#allocation2], 4
      %s36 = int_to_ptr.vmem [resolvable:$true] %s35
      %41 = dma.hbm_to_vmem [thread:$0]  %s34, 2048, %s36, [#allocation3], 128, 128, 8
    $region17: #{tpu_custom_call.1} parent=1 // pred_fallthru
      _
    // Predicated region
    $region18: #{tpu_custom_call.1} parent=1 // pred_check
      _
    $region19: #{tpu_custom_call.1} parent=1 // pred_check_branch
      %43 = sbr.rel (0) target = $region21
    $region20: #{tpu_custom_call.1} parent=1 // pred_region
      %45 = vsyncadd [#allocation6], 0
      %s46 = sshll.u32 %s4, 4
      %s47 = int_to_ptr.hbm [resolvable:$true] %s46
      %s48 = sshll.u32 [#allocation5], 4
      %s49 = int_to_ptr.vmem [resolvable:$true] %s48
      %54 = dma.hbm_to_vmem [thread:$0]  %s47, 2048, %s49, [#allocation6], 128, 128, 8
    $region21: #{tpu_custom_call.1} parent=1 // pred_fallthru
      _
    // Predicated region
    $region22: #{tpu_custom_call.1} parent=1 // pred_check
      _
    $region23: #{tpu_custom_call.1} parent=1 // pred_check_branch
      %56 = sbr.rel (0) target = $region25
    $region24: #{tpu_custom_call.1} parent=1 // pred_region
      _
    $region25: #{tpu_custom_call.1} parent=1 // pred_fallthru
      _
    // Predicated region
    $region26: #{tpu_custom_call.1} parent=1 // pred_check
      _
    $region27: #{tpu_custom_call.1} parent=1 // pred_check_branch
      %58 = sbr.rel (0) target = $region29
    $region28: #{tpu_custom_call.1} parent=1 // pred_region
      %60 = vsyncadd [#allocation6], 0
      %s61 = sshll.u32 %s6, 4
      %s62 = int_to_ptr.hbm [resolvable:$true] %s61
      %s63 = sshll.u32 [#allocation7], 4
      %s64 = int_to_ptr.vmem [resolvable:$true] %s63
      %69 = dma.hbm_to_vmem [thread:$0]  %s62, 6144, %s64, [#allocation6], 128, 128, 8
    $region29: #{tpu_custom_call.1} parent=1 // pred_fallthru
      _
    // Predicated region
    $region30: #{tpu_custom_call.1} parent=1 // pred_check
      _
    $region31: #{tpu_custom_call.1} parent=1 // pred_check_branch
      %71 = sbr.rel (0) target = $region33
    $region32: #{tpu_custom_call.1} parent=1 // pred_region
      %73 = vsyncadd [#allocation9], 0
      %s74 = sshll.u32 %s7, 4
      %s75 = int_to_ptr.hbm [resolvable:$true] %s74
      %s76 = sshll.u32 [#allocation8], 4
      %s77 = int_to_ptr.vmem [resolvable:$true] %s76
      %82 = dma.hbm_to_vmem [thread:$0]  %s75, 2048, %s77, [#allocation9], 128, 128, 8
    $region33: #{tpu_custom_call.1} parent=1 // pred_fallthru
      _
    // Predicated region
    $region34: #{tpu_custom_call.1} parent=1 // pred_check
      _
    $region35: #{tpu_custom_call.1} parent=1 // pred_check_branch
      %84 = sbr.rel (0) target = $region37
    $region36: #{tpu_custom_call.1} parent=1 // pred_region
      _
    $region37: #{tpu_custom_call.1} parent=1 // pred_fallthru
      _
    // Predicated region
    $region38: #{tpu_custom_call.1} parent=1 // pred_check
      _
    $region39: #{tpu_custom_call.1} parent=1 // pred_check_branch
      %86 = sbr.rel (0) target = $region41
    $region40: #{tpu_custom_call.1} parent=1 // pred_region
      %88 = vsyncadd [#allocation9], 0
      %s89 = sshll.u32 %s9, 4
      %s90 = int_to_ptr.hbm [resolvable:$true] %s89
      %s91 = sshll.u32 [#allocation10], 4
      %s92 = int_to_ptr.vmem [resolvable:$true] %s91
      %97 = dma.hbm_to_vmem [thread:$0]  %s90, 2048, %s92, [#allocation9], 128, 128, 8
    $region41: #{tpu_custom_call.1} parent=1 // pred_fallthru
      _
    // Predicated region
    $region42: #{tpu_custom_call.1} parent=1 // pred_check
      _
    $region43: #{tpu_custom_call.1} parent=1 // pred_check_branch
      %99 = sbr.rel (0) target = $region45
    $region44: #{tpu_custom_call.1} parent=1 // pred_region
      _
    $region45: #{tpu_custom_call.1} parent=1 // pred_fallthru
      _
    // Predicated region
    $region46: #{tpu_custom_call.1} parent=1 // pred_check
      _
    $region47: #{tpu_custom_call.1} parent=1 // pred_check_branch
      %101 = sbr.rel (0) target = $region49
    $region48: #{tpu_custom_call.1} parent=1 // pred_region
      %103 = vsyncadd [#allocation12], 0
      %s104 = sshll.u32 %s11, 4
      %s105 = int_to_ptr.hbm [resolvable:$true] %s104
      %s106 = sshll.u32 [#allocation11], 4
      %s107 = int_to_ptr.vmem [resolvable:$true] %s106
      %112 = dma.hbm_to_vmem [thread:$0]  %s105, 2048, %s107, [#allocation12], 128, 128, 8
    $region49: #{tpu_custom_call.1} parent=1 // pred_fallthru
      _
    // Predicated region
    $region50: #{tpu_custom_call.1} parent=1 // pred_check
      _
    $region51: #{tpu_custom_call.1} parent=1 // pred_check_branch
      %114 = sbr.rel (0) target = $region53
    $region52: #{tpu_custom_call.1} parent=1 // pred_region
      _
    $region53: #{tpu_custom_call.1} parent=1 // pred_fallthru
      _
    // Predicated region
    $region54: #{tpu_custom_call.1} parent=1 // pred_check
      _
    $region55: #{tpu_custom_call.1} parent=1 // pred_check_branch
      %116 = sbr.rel (0) target = $region57
    $region56: #{tpu_custom_call.1} parent=1 // pred_region
      %118 = dma.done [#allocation3], 2048
    $region57: #{tpu_custom_call.1} parent=1 // pred_fallthru
      _
    // Predicated region
    $region58: #{tpu_custom_call.1} parent=1 // pred_check
      _
    $region59: #{tpu_custom_call.1} parent=1 // pred_check_branch
      %120 = sbr.rel (0) target = $region61
    $region60: #{tpu_custom_call.1} parent=1 // pred_region
      %122 = dma.done [#allocation6], 2048
    $region61: #{tpu_custom_call.1} parent=1 // pred_fallthru
      _
    // Predicated region
    $region62: #{tpu_custom_call.1} parent=1 // pred_check
      _
    $region63: #{tpu_custom_call.1} parent=1 // pred_check_branch
      %124 = sbr.rel (0) target = $region65
    $region64: #{tpu_custom_call.1} parent=1 // pred_region
      %126 = dma.done [#allocation6], 6144
    $region65: #{tpu_custom_call.1} parent=1 // pred_fallthru
      _
    // Predicated region
    $region66: #{tpu_custom_call.1} parent=1 // pred_check
      _
    $region67: #{tpu_custom_call.1} parent=1 // pred_check_branch
      %128 = sbr.rel (0) target = $region69
    $region68: #{tpu_custom_call.1} parent=1 // pred_region
      %130 = dma.done [#allocation9], 2048
    $region69: #{tpu_custom_call.1} parent=1 // pred_fallthru
      _
    // Predicated region
    $region70: #{tpu_custom_call.1} parent=1 // pred_check
      _
    $region71: #{tpu_custom_call.1} parent=1 // pred_check_branch
      %132 = sbr.rel (0) target = $region73
    $region72: #{tpu_custom_call.1} parent=1 // pred_region
      %134 = dma.done [#allocation9], 2048
    $region73: #{tpu_custom_call.1} parent=1 // pred_fallthru
      _
    // Predicated region
    $region74: #{tpu_custom_call.1} parent=1 // pred_check
      _
    $region75: #{tpu_custom_call.1} parent=1 // pred_check_branch
      %136 = sbr.rel (0) target = $region77
    $region76: #{tpu_custom_call.1} parent=1 // pred_region
      %138 = dma.done [#allocation12], 2048
    $region77: #{tpu_custom_call.1} parent=1 // pred_fallthru
      _
    %v139 = vld [vmem:[%s8] sm:$0x1]
    %v141 = vperm.slane %v139, 0
    %v143 = vadd.f32 %v141, 0.0
    %v144 = vld [vmem:[%s0] sm:$0xff]
    %v145 = vld [vmem:[%s5] sm:$0x1f]
    %147 = vset.pattern.permute.xlu0 0
    %148 = vperm.xlu0 %147, %v144
    %v149 = vpop.permute.xlu0 %148
    %v151 = vperm.slane %v145, 0
    %v152 = vmul.f32 %v149, %v151
    %v153 = vadd.f32 %v143, %v152
    %154 = vset.pattern.permute.xlu0 1
    %155 = vperm.xlu0 %154, %v144
    %v156 = vpop.permute.xlu0 %155
    %v158 = vperm.slane %v145, 1
    %v159 = vmul.f32 %v156, %v158
    %v160 = vadd.f32 %v153, %v159
    %161 = vset.pattern.permute.xlu0 2
    %162 = vperm.xlu0 %161, %v144
    %v163 = vpop.permute.xlu0 %162
    %v165 = vperm.slane %v145, 2
    %v166 = vmul.f32 %v163, %v165
    %v167 = vadd.f32 %v160, %v166
    %168 = vset.pattern.permute.xlu0 3
    %169 = vperm.xlu0 %168, %v144
    %v170 = vpop.permute.xlu0 %169
    %v172 = vperm.slane %v145, 3
    %v173 = vmul.f32 %v170, %v172
    %v174 = vadd.f32 %v167, %v173
    %175 = vset.pattern.permute.xlu0 4
    %176 = vperm.xlu0 %175, %v144
    %v177 = vpop.permute.xlu0 %176
    %v179 = vperm.slane %v145, 4
    %v180 = vmul.f32 %v177, %v179
    %v181 = vadd.f32 %v174, %v180
    %v182 = vld [vmem:[%s1] sm:$0xff]
    %v183 = vlaneseq
    %v184 = vand.u32 %v183, 127
    %v185 = vld [vmem:[#allocation2] sm:$0xff]
    %v186 = vld [vmem:[#allocation2 + $0x8] sm:$0xff]
    %v187 = vld [vmem:[#allocation2 + $0x10] sm:$0xff]
    %v188 = vld [vmem:[#allocation2 + $0x18] sm:$0xff]
    %v189 = vld [vmem:[#allocation2 + $0x20] sm:$0xff]
    %v190 = vld [vmem:[#allocation2 + $0x28] sm:$0xff]
    %v191 = vld [vmem:[#allocation2 + $0x30] sm:$0xff]
    %v192 = vld [vmem:[#allocation2 + $0x38] sm:$0xff]
    %v193 = vld [vmem:[#allocation2 + $0x40] sm:$0xff]
    %v194 = vld [vmem:[#allocation2 + $0x48] sm:$0xff]
    %v195 = vld [vmem:[#allocation2 + $0x50] sm:$0xff]
    %v196 = vld [vmem:[#allocation2 + $0x58] sm:$0xff]
    %v197 = vld [vmem:[#allocation2 + $0x60] sm:$0xff]
    %v198 = vld [vmem:[#allocation2 + $0x68] sm:$0xff]
    %v199 = vld [vmem:[#allocation2 + $0x70] sm:$0xff]
    %v200 = vld [vmem:[#allocation2 + $0x78] sm:$0xff]
    %201 = vset.pattern.permute.xlu0 0
    %202 = vperm.xlu0 %201, %v182
    %v203 = vpop.permute.xlu0 %202
    %vm204 = vcmp.eq.s32.totalorder %v184, %v203
    %v205 = vsel %vm204, 1, 0
    %v206 = vcvt.s32.f32 %v205
    %207 = vmatpush.msra.mxu0 %v200
    %208 = vmatpush.msra.mxu0 %v199
    %209 = vmatpush.msra.mxu0 %v198
    %210 = vmatpush.msra.mxu0 %v197
    %211 = vmatpush.msra.mxu0 %v196
    %212 = vmatpush.msra.mxu0 %v195
    %213 = vmatpush.msra.mxu0 %v194
    %214 = vmatpush.msra.mxu0 %v193
    %215 = vmatpush.msra.mxu0 %v192
    %216 = vmatpush.msra.mxu0 %v191
    %217 = vmatpush.msra.mxu0 %v190
    %218 = vmatpush.msra.mxu0 %v189
    %219 = vmatpush.msra.mxu0 %v188
    %220 = vmatpush.msra.mxu0 %v187
    %221 = vmatpush.msra.mxu0 %v186
    %222 = vmatpush.msra.mxu0 %v185
    %223 = vmatmul.f32.gmra.mxu0 %v206
    %v224 = vpop.f32.mrf.mxu0
    %v225 = vadd.f32 0.0, %v224
    %226 = vdwg.mxu0
    %v227 = vld [vmem:[#allocation7] sm:$0xff]
    %v228 = vld [vmem:[#allocation7 + $0x8] sm:$0xff]
    %v229 = vld [vmem:[#allocation7 + $0x10] sm:$0xff]
    %v230 = vld [vmem:[#allocation7 + $0x18] sm:$0xff]
    %v231 = vld [vmem:[#allocation7 + $0x20] sm:$0xff]
    %v232 = vld [vmem:[#allocation7 + $0x28] sm:$0xff]
    %v233 = vld [vmem:[#allocation7 + $0x30] sm:$0xff]
    %v234 = vld [vmem:[#allocation7 + $0x38] sm:$0xff]
    %v235 = vld [vmem:[#allocation7 + $0x40] sm:$0xff]
    %v236 = vld [vmem:[#allocation7 + $0x48] sm:$0xff]
    %v237 = vld [vmem:[#allocation7 + $0x50] sm:$0xff]
    %v238 = vld [vmem:[#allocation7 + $0x58] sm:$0xff]
    %v239 = vld [vmem:[#allocation7 + $0x60] sm:$0xff]
    %v240 = vld [vmem:[#allocation7 + $0x68] sm:$0xff]
    %v241 = vld [vmem:[#allocation7 + $0x70] sm:$0xff]
    %v242 = vld [vmem:[#allocation7 + $0x78] sm:$0xff]
    %243 = vmatpush.msra.mxu0 %v242
    %244 = vmatpush.msra.mxu0 %v241
    %245 = vmatpush.msra.mxu0 %v240
    %246 = vmatpush.msra.mxu0 %v239
    %247 = vmatpush.msra.mxu0 %v238
    %248 = vmatpush.msra.mxu0 %v237
    %249 = vmatpush.msra.mxu0 %v236
    %250 = vmatpush.msra.mxu0 %v235
    %251 = vmatpush.msra.mxu0 %v234
    %252 = vmatpush.msra.mxu0 %v233
    %253 = vmatpush.msra.mxu0 %v232
    %254 = vmatpush.msra.mxu0 %v231
    %255 = vmatpush.msra.mxu0 %v230
    %256 = vmatpush.msra.mxu0 %v229
    %257 = vmatpush.msra.mxu0 %v228
    %258 = vmatpush.msra.mxu0 %v227
    %259 = vmatmul.f32.gmra.mxu0 %v225
    %v260 = vpop.f32.mrf.mxu0
    %v261 = vadd.f32 0.0, %v260
    %262 = vdwg.mxu0
    %v263 = vadd.f32 %v181, %v261
    %264 = vset.pattern.permute.xlu0 1
    %265 = vperm.xlu0 %264, %v182
    %v266 = vpop.permute.xlu0 %265
    %vm267 = vcmp.eq.s32.totalorder %v184, %v266
    %v268 = vsel %vm267, 1, 0
    %v269 = vcvt.s32.f32 %v268
    %270 = vmatpush.msra.mxu0 %v200
    %271 = vmatpush.msra.mxu0 %v199
    %272 = vmatpush.msra.mxu0 %v198
    %273 = vmatpush.msra.mxu0 %v197
    %274 = vmatpush.msra.mxu0 %v196
    %275 = vmatpush.msra.mxu0 %v195
    %276 = vmatpush.msra.mxu0 %v194
    %277 = vmatpush.msra.mxu0 %v193
    %278 = vmatpush.msra.mxu0 %v192
    %279 = vmatpush.msra.mxu0 %v191
    %280 = vmatpush.msra.mxu0 %v190
    %281 = vmatpush.msra.mxu0 %v189
    %282 = vmatpush.msra.mxu0 %v188
    %283 = vmatpush.msra.mxu0 %v187
    %284 = vmatpush.msra.mxu0 %v186
    %285 = vmatpush.msra.mxu0 %v185
    %286 = vmatmul.f32.gmra.mxu0 %v269
    %v287 = vpop.f32.mrf.mxu0
    %v288 = vadd.f32 0.0, %v287
    %289 = vdwg.mxu0
    %s290 = scalar_lea.vmem [#allocation7], 128
    %v291 = vld [vmem:[%s290] sm:$0xff]
    %v292 = vld [vmem:[%s290 + $0x8] sm:$0xff]
    %v293 = vld [vmem:[%s290 + $0x10] sm:$0xff]
    %v294 = vld [vmem:[%s290 + $0x18] sm:$0xff]
    %v295 = vld [vmem:[%s290 + $0x20] sm:$0xff]
    %v296 = vld [vmem:[%s290 + $0x28] sm:$0xff]
    %v297 = vld [vmem:[%s290 + $0x30] sm:$0xff]
    %v298 = vld [vmem:[%s290 + $0x38] sm:$0xff]
    %v299 = vld [vmem:[%s290 + $0x40] sm:$0xff]
    %v300 = vld [vmem:[%s290 + $0x48] sm:$0xff]
    %v301 = vld [vmem:[%s290 + $0x50] sm:$0xff]
    %v302 = vld [vmem:[%s290 + $0x58] sm:$0xff]
    %v303 = vld [vmem:[%s290 + $0x60] sm:$0xff]
    %v304 = vld [vmem:[%s290 + $0x68] sm:$0xff]
    %v305 = vld [vmem:[%s290 + $0x70] sm:$0xff]
    %v306 = vld [vmem:[%s290 + $0x78] sm:$0xff]
    %307 = vmatpush.msra.mxu0 %v306
    %308 = vmatpush.msra.mxu0 %v305
    %309 = vmatpush.msra.mxu0 %v304
    %310 = vmatpush.msra.mxu0 %v303
    %311 = vmatpush.msra.mxu0 %v302
    %312 = vmatpush.msra.mxu0 %v301
    %313 = vmatpush.msra.mxu0 %v300
    %314 = vmatpush.msra.mxu0 %v299
    %315 = vmatpush.msra.mxu0 %v298
    %316 = vmatpush.msra.mxu0 %v297
    %317 = vmatpush.msra.mxu0 %v296
    %318 = vmatpush.msra.mxu0 %v295
    %319 = vmatpush.msra.mxu0 %v294
    %320 = vmatpush.msra.mxu0 %v293
    %321 = vmatpush.msra.mxu0 %v292
    %322 = vmatpush.msra.mxu0 %v291
    %323 = vmatmul.f32.gmra.mxu0 %v288
    %v324 = vpop.f32.mrf.mxu0
    %v325 = vadd.f32 0.0, %v324
    %326 = vdwg.mxu0
    %v327 = vadd.f32 %v263, %v325
    %328 = vset.pattern.permute.xlu0 2
    %329 = vperm.xlu0 %328, %v182
    %v330 = vpop.permute.xlu0 %329
    %vm331 = vcmp.eq.s32.totalorder %v184, %v330
    %v332 = vsel %vm331, 1, 0
    %v333 = vcvt.s32.f32 %v332
    %334 = vmatpush.msra.mxu0 %v200
    %335 = vmatpush.msra.mxu0 %v199
    %336 = vmatpush.msra.mxu0 %v198
    %337 = vmatpush.msra.mxu0 %v197
    %338 = vmatpush.msra.mxu0 %v196
    %339 = vmatpush.msra.mxu0 %v195
    %340 = vmatpush.msra.mxu0 %v194
    %341 = vmatpush.msra.mxu0 %v193
    %342 = vmatpush.msra.mxu0 %v192
    %343 = vmatpush.msra.mxu0 %v191
    %344 = vmatpush.msra.mxu0 %v190
    %345 = vmatpush.msra.mxu0 %v189
    %346 = vmatpush.msra.mxu0 %v188
    %347 = vmatpush.msra.mxu0 %v187
    %348 = vmatpush.msra.mxu0 %v186
    %349 = vmatpush.msra.mxu0 %v185
    %350 = vmatmul.f32.gmra.mxu0 %v333
    %v351 = vpop.f32.mrf.mxu0
    %v352 = vadd.f32 0.0, %v351
    %353 = vdwg.mxu0
    %s354 = scalar_lea.vmem [#allocation7], 256
    %v355 = vld [vmem:[%s354] sm:$0xff]
    %v356 = vld [vmem:[%s354 + $0x8] sm:$0xff]
    %v357 = vld [vmem:[%s354 + $0x10] sm:$0xff]
    %v358 = vld [vmem:[%s354 + $0x18] sm:$0xff]
    %v359 = vld [vmem:[%s354 + $0x20] sm:$0xff]
    %v360 = vld [vmem:[%s354 + $0x28] sm:$0xff]
    %v361 = vld [vmem:[%s354 + $0x30] sm:$0xff]
    %v362 = vld [vmem:[%s354 + $0x38] sm:$0xff]
    %v363 = vld [vmem:[%s354 + $0x40] sm:$0xff]
    %v364 = vld [vmem:[%s354 + $0x48] sm:$0xff]
    %v365 = vld [vmem:[%s354 + $0x50] sm:$0xff]
    %v366 = vld [vmem:[%s354 + $0x58] sm:$0xff]
    %v367 = vld [vmem:[%s354 + $0x60] sm:$0xff]
    %v368 = vld [vmem:[%s354 + $0x68] sm:$0xff]
    %v369 = vld [vmem:[%s354 + $0x70] sm:$0xff]
    %v370 = vld [vmem:[%s354 + $0x78] sm:$0xff]
    %371 = vmatpush.msra.mxu0 %v370
    %372 = vmatpush.msra.mxu0 %v369
    %373 = vmatpush.msra.mxu0 %v368
    %374 = vmatpush.msra.mxu0 %v367
    %375 = vmatpush.msra.mxu0 %v366
    %376 = vmatpush.msra.mxu0 %v365
    %377 = vmatpush.msra.mxu0 %v364
    %378 = vmatpush.msra.mxu0 %v363
    %379 = vmatpush.msra.mxu0 %v362
    %380 = vmatpush.msra.mxu0 %v361
    %381 = vmatpush.msra.mxu0 %v360
    %382 = vmatpush.msra.mxu0 %v359
    %383 = vmatpush.msra.mxu0 %v358
    %384 = vmatpush.msra.mxu0 %v357
    %385 = vmatpush.msra.mxu0 %v356
    %386 = vmatpush.msra.mxu0 %v355
    %387 = vmatmul.f32.gmra.mxu0 %v352
    %v388 = vpop.f32.mrf.mxu0
    %v389 = vadd.f32 0.0, %v388
    %390 = vdwg.mxu0
    %v391 = vadd.f32 %v327, %v389
    %v392 = vld [vmem:[%s2] sm:$0xff]
    %393 = vset.pattern.permute.xlu0 0
    %394 = vperm.xlu0 %393, %v392
    %v395 = vpop.permute.xlu0 %394
    %vm396 = vcmp.eq.s32.totalorder %v184, %v395
    %v397 = vsel %vm396, 1, 0
    %v398 = vcvt.s32.f32 %v397
    %v399 = vld [vmem:[#allocation5] sm:$0xff]
    %v400 = vld [vmem:[#allocation5 + $0x8] sm:$0xff]
    %v401 = vld [vmem:[#allocation5 + $0x10] sm:$0xff]
    %v402 = vld [vmem:[#allocation5 + $0x18] sm:$0xff]
    %v403 = vld [vmem:[#allocation5 + $0x20] sm:$0xff]
    %v404 = vld [vmem:[#allocation5 + $0x28] sm:$0xff]
    %v405 = vld [vmem:[#allocation5 + $0x30] sm:$0xff]
    %v406 = vld [vmem:[#allocation5 + $0x38] sm:$0xff]
    %v407 = vld [vmem:[#allocation5 + $0x40] sm:$0xff]
    %v408 = vld [vmem:[#allocation5 + $0x48] sm:$0xff]
    %v409 = vld [vmem:[#allocation5 + $0x50] sm:$0xff]
    %v410 = vld [vmem:[#allocation5 + $0x58] sm:$0xff]
    %v411 = vld [vmem:[#allocation5 + $0x60] sm:$0xff]
    %v412 = vld [vmem:[#allocation5 + $0x68] sm:$0xff]
    %v413 = vld [vmem:[#allocation5 + $0x70] sm:$0xff]
    %v414 = vld [vmem:[#allocation5 + $0x78] sm:$0xff]
    %415 = vmatpush.msra.mxu0 %v414
    %416 = vmatpush.msra.mxu0 %v413
    %417 = vmatpush.msra.mxu0 %v412
    %418 = vmatpush.msra.mxu0 %v411
    %419 = vmatpush.msra.mxu0 %v410
    %420 = vmatpush.msra.mxu0 %v409
    %421 = vmatpush.msra.mxu0 %v408
    %422 = vmatpush.msra.mxu0 %v407
    %423 = vmatpush.msra.mxu0 %v406
    %424 = vmatpush.msra.mxu0 %v405
    %425 = vmatpush.msra.mxu0 %v404
    %426 = vmatpush.msra.mxu0 %v403
    %427 = vmatpush.msra.mxu0 %v402
    %428 = vmatpush.msra.mxu0 %v401
    %429 = vmatpush.msra.mxu0 %v400
    %430 = vmatpush.msra.mxu0 %v399
    %431 = vmatmul.f32.gmra.mxu0 %v398
    %v432 = vpop.f32.mrf.mxu0
    %v433 = vadd.f32 0.0, %v432
    %434 = vdwg.mxu0
    %v435 = vld [vmem:[#allocation8] sm:$0xff]
    %v436 = vld [vmem:[#allocation8 + $0x8] sm:$0xff]
    %v437 = vld [vmem:[#allocation8 + $0x10] sm:$0xff]
    %v438 = vld [vmem:[#allocation8 + $0x18] sm:$0xff]
    %v439 = vld [vmem:[#allocation8 + $0x20] sm:$0xff]
    %v440 = vld [vmem:[#allocation8 + $0x28] sm:$0xff]
    %v441 = vld [vmem:[#allocation8 + $0x30] sm:$0xff]
    %v442 = vld [vmem:[#allocation8 + $0x38] sm:$0xff]
    %v443 = vld [vmem:[#allocation8 + $0x40] sm:$0xff]
    %v444 = vld [vmem:[#allocation8 + $0x48] sm:$0xff]
    %v445 = vld [vmem:[#allocation8 + $0x50] sm:$0xff]
    %v446 = vld [vmem:[#allocation8 + $0x58] sm:$0xff]
    %v447 = vld [vmem:[#allocation8 + $0x60] sm:$0xff]
    %v448 = vld [vmem:[#allocation8 + $0x68] sm:$0xff]
    %v449 = vld [vmem:[#allocation8 + $0x70] sm:$0xff]
    %v450 = vld [vmem:[#allocation8 + $0x78] sm:$0xff]
    %451 = vmatpush.msra.mxu0 %v450
    %452 = vmatpush.msra.mxu0 %v449
    %453 = vmatpush.msra.mxu0 %v448
    %454 = vmatpush.msra.mxu0 %v447
    %455 = vmatpush.msra.mxu0 %v446
    %456 = vmatpush.msra.mxu0 %v445
    %457 = vmatpush.msra.mxu0 %v444
    %458 = vmatpush.msra.mxu0 %v443
    %459 = vmatpush.msra.mxu0 %v442
    %460 = vmatpush.msra.mxu0 %v441
    %461 = vmatpush.msra.mxu0 %v440
    %462 = vmatpush.msra.mxu0 %v439
    %463 = vmatpush.msra.mxu0 %v438
    %464 = vmatpush.msra.mxu0 %v437
    %465 = vmatpush.msra.mxu0 %v436
    %466 = vmatpush.msra.mxu0 %v435
    %467 = vmatmul.f32.gmra.mxu0 %v433
    %v468 = vpop.f32.mrf.mxu0
    %v469 = vadd.f32 0.0, %v468
    %470 = vdwg.mxu0
    %v471 = vadd.f32 %v391, %v469
    %v472 = vmax.f32 %v471, 0.0
    %v473 = vld [vmem:[#allocation10] sm:$0xff]
    %v474 = vld [vmem:[#allocation10 + $0x8] sm:$0xff]
    %v475 = vld [vmem:[#allocation10 + $0x10] sm:$0xff]
    %v476 = vld [vmem:[#allocation10 + $0x18] sm:$0xff]
    %v477 = vld [vmem:[#allocation10 + $0x20] sm:$0xff]
    %v478 = vld [vmem:[#allocation10 + $0x28] sm:$0xff]
    %v479 = vld [vmem:[#allocation10 + $0x30] sm:$0xff]
    %v480 = vld [vmem:[#allocation10 + $0x38] sm:$0xff]
    %v481 = vld [vmem:[#allocation10 + $0x40] sm:$0xff]
    %v482 = vld [vmem:[#allocation10 + $0x48] sm:$0xff]
    %v483 = vld [vmem:[#allocation10 + $0x50] sm:$0xff]
    %v484 = vld [vmem:[#allocation10 + $0x58] sm:$0xff]
    %v485 = vld [vmem:[#allocation10 + $0x60] sm:$0xff]
    %v486 = vld [vmem:[#allocation10 + $0x68] sm:$0xff]
    %v487 = vld [vmem:[#allocation10 + $0x70] sm:$0xff]
    %v488 = vld [vmem:[#allocation10 + $0x78] sm:$0xff]
    %v489 = vld [vmem:[%s10] sm:$0x1]
    %v491 = vperm.slane %v489, 0
    %493 = vmatpush.msra.mxu0 %v488
    %494 = vmatpush.msra.mxu0 %v487
    %495 = vmatpush.msra.mxu0 %v486
    %496 = vmatpush.msra.mxu0 %v485
    %497 = vmatpush.msra.mxu0 %v484
    %498 = vmatpush.msra.mxu0 %v483
    %499 = vmatpush.msra.mxu0 %v482
    %500 = vmatpush.msra.mxu0 %v481
    %501 = vmatpush.msra.mxu0 %v480
    %502 = vmatpush.msra.mxu0 %v479
    %503 = vmatpush.msra.mxu0 %v478
    %504 = vmatpush.msra.mxu0 %v477
    %505 = vmatpush.msra.mxu0 %v476
    %506 = vmatpush.msra.mxu0 %v475
    %507 = vmatpush.msra.mxu0 %v474
    %508 = vmatpush.msra.mxu0 %v473
    %509 = vmatmul.f32.gmra.mxu0 %v472
    %v510 = vpop.f32.mrf.mxu0
    %v511 = vadd.f32 %v491, %v510
    %512 = vdwg.mxu0
    %v513 = vmax.f32 %v511, 0.0
    %v514 = vld [vmem:[#allocation11] sm:$0xff]
    %v515 = vld [vmem:[#allocation11 + $0x8] sm:$0xff]
    %v516 = vld [vmem:[#allocation11 + $0x10] sm:$0xff]
    %v517 = vld [vmem:[#allocation11 + $0x18] sm:$0xff]
    %v518 = vld [vmem:[#allocation11 + $0x20] sm:$0xff]
    %v519 = vld [vmem:[#allocation11 + $0x28] sm:$0xff]
    %v520 = vld [vmem:[#allocation11 + $0x30] sm:$0xff]
    %v521 = vld [vmem:[#allocation11 + $0x38] sm:$0xff]
    %v522 = vld [vmem:[#allocation11 + $0x40] sm:$0xff]
    %v523 = vld [vmem:[#allocation11 + $0x48] sm:$0xff]
    %v524 = vld [vmem:[#allocation11 + $0x50] sm:$0xff]
    %v525 = vld [vmem:[#allocation11 + $0x58] sm:$0xff]
    %v526 = vld [vmem:[#allocation11 + $0x60] sm:$0xff]
    %v527 = vld [vmem:[#allocation11 + $0x68] sm:$0xff]
    %v528 = vld [vmem:[#allocation11 + $0x70] sm:$0xff]
    %v529 = vld [vmem:[#allocation11 + $0x78] sm:$0xff]
    %v530 = vld [vmem:[%s12] sm:$0x1]
    %v532 = vperm.slane %v530, 0
    %534 = vmatpush.msra.mxu0 %v529
    %535 = vmatpush.msra.mxu0 %v528
    %536 = vmatpush.msra.mxu0 %v527
    %537 = vmatpush.msra.mxu0 %v526
    %538 = vmatpush.msra.mxu0 %v525
    %539 = vmatpush.msra.mxu0 %v524
    %540 = vmatpush.msra.mxu0 %v523
    %541 = vmatpush.msra.mxu0 %v522
    %542 = vmatpush.msra.mxu0 %v521
    %543 = vmatpush.msra.mxu0 %v520
    %544 = vmatpush.msra.mxu0 %v519
    %545 = vmatpush.msra.mxu0 %v518
    %546 = vmatpush.msra.mxu0 %v517
    %547 = vmatpush.msra.mxu0 %v516
    %548 = vmatpush.msra.mxu0 %v515
    %549 = vmatpush.msra.mxu0 %v514
    %550 = vmatmul.f32.gmra.mxu0 %v513
    %v551 = vpop.f32.mrf.mxu0
    %v552 = vadd.f32 %v532, %v551
    %553 = vdwg.mxu0
    %vm554 = vcmp.lt.s32.totalorder %v184, 10
    %v555 = vsel %vm554, %v552, -1e+30
    %556 = vmax.xlane.f32.xlu0 %v555
    %v557 = vpop.xlane.xlu0 %556
    %v558 = vsub.f32 %v555, %v557
    %v559 = vmul.f32 %v558, 1.442695
    %v560 = vpow.pop %v559
    %561 = vadd.xlane.f32.xlu0 %v560
    %v562 = vpop.xlane.xlu0 %561
    %v563 = vlog2.pop %v562
    %v564 = vmul.f32 %v563, 0.6931472
    %v565 = vsub.f32 %v558, %v564
    %vm566 = vcmask 80896
    %567 = vst.msk [vmem:[#allocation13] sm:$0xff] %vm566, %v565
    // Predicated region
    $region78: #{tpu_custom_call.1} parent=1 // pred_check
      _
    $region79: #{tpu_custom_call.1} parent=1 // pred_check_branch
      %569 = sbr.rel (0) target = $region81
    $region80: #{tpu_custom_call.1} parent=1 // pred_region
      %571 = vsyncadd [#allocation4], 0
      %s573 = sshll.u32 [#allocation13], 4
      %s574 = int_to_ptr.vmem [resolvable:$true] %s573
      %s575 = sshll.u32 %s13, 4
      %s576 = int_to_ptr.hbm [resolvable:$true] %s575
      %578 = dma.vmem_to_hbm [thread:$0]  %s574, 128, %s576, [#allocation4]
    $region81: #{tpu_custom_call.1} parent=1 // pred_fallthru
      _
    // Predicated region
    $region82: #{tpu_custom_call.1} parent=1 // pred_check
      _
    $region83: #{tpu_custom_call.1} parent=1 // pred_check_branch
      %580 = sbr.rel (0) target = $region85
    $region84: #{tpu_custom_call.1} parent=1 // pred_region
      %582 = dma.done [#allocation4], 128
    $region85: #{tpu_custom_call.1} parent=1 // pred_fallthru
      _
    %583 = vsyncpa [#allocation3], 1
    %584 = vsyncpa [#allocation6], 1
    %585 = vsyncpa [#allocation9], 1
    %586 = vsyncpa [#allocation12], 1
    %587 = vsyncpa [#allocation4], 1

</llo_original>
